<compile_context>
chip_gen: v6e
topology: v6e:2x2x1
jax: 0.10.0
libtpu: 0.0.40
codegen_flags: <defaults>
</compile_context>

<pallas_src>
import math
from functools import partial

import jax
import jax.numpy as jnp
from jax.experimental import pallas as pl
from jax.experimental.pallas import tpu as pltpu

VMEM = pltpu.MemorySpace.VMEM
SMEM = pltpu.MemorySpace.SMEM

_LANE = 128      # pad feature dims to this many lanes (vreg / MXU width)
_MAX_TB = 4096   # max batch-tile rows (multiple of 8; ~12 MiB VMEM at 128 lanes)


def _rup(n, m):
    return ((n + m - 1) // m) * m


def _pick_batch_tile(b_rows):
    """Batch tile: large (amortizes ~0.35us/step overhead), multiple of 8, and
    >=2 grid steps once B is big so v7x's two TensorCores both get work."""
    if b_rows <= _MAX_TB:
        if b_rows > 1024:
            return _rup(pl.cdiv(b_rows, 2), 8)   # exactly 2 steps -> megacore
        return b_rows                            # single step; overhead negligible
    return _MAX_TB


def _prep_padded_params(w1, b1, w2, b2):
    """Transpose weights once to MXU-natural (in, out) layout and zero-pad every
    feature dim up to 128 lanes. Exact: padded entries are zero."""
    H, N = w1.shape
    O = w2.shape[0]
    Np, Hp, Op = _rup(N, _LANE), _rup(H, _LANE), _rup(O, _LANE)
    w1t = jnp.zeros((Np, Hp), w1.dtype).at[:N, :H].set(w1.T)
    w2t = jnp.zeros((Hp, Op), w2.dtype).at[:H, :O].set(w2.T)
    b1p = jnp.zeros((1, Hp), b1.dtype).at[0, :H].set(b1)
    b2p = jnp.zeros((1, Op), b2.dtype).at[0, :O].set(b2)
    return w1t, b1p, w2t, b2p, Np, Hp, Op


def _pad_dist(d, rows, cols):
    """Transpose a PyTorch-layout (out, in) distance matrix to (in, out) and
    zero-pad to the padded weight shape (padded weights are 0 -> exact cost)."""
    n, m = d.shape[1], d.shape[0]
    return jnp.zeros((rows, cols), jnp.float32).at[:n, :m].set(
        d.T.astype(jnp.float32))


# ---------------------------------------------------------------------------
# Fused kernel: Linear -> ReLU -> Linear forward  +  sum(|W|*Dist) for both layers
# (batch-gridded; weights / biases / distance matrices resident via constant
#  index maps; cost written exactly once on grid step 0)
# ---------------------------------------------------------------------------
def _fused_fwd_cost_kernel(x_ref, w1_ref, b1_ref, w2_ref, b2_ref,
                           d1_ref, d2_ref, y_ref, cost_ref):
    # x:(TB,Np)  w1:(Np,Hp)  b1:(1,Hp)  w2:(Hp,Op)  b2:(1,Op)  d1:(Np,Hp)  d2:(Hp,Op)
    x = x_ref[...]
    w1 = w1_ref[...]
    w2 = w2_ref[...]

    h = jnp.dot(x, w1, preferred_element_type=jnp.float32)
    h = jnp.maximum(h + b1_ref[...], 0.0)
    y = jnp.dot(h, w2, preferred_element_type=jnp.float32)
    y_ref[...] = (y + b2_ref[...]).astype(y_ref.dtype)

    # Spatial wiring cost: weights are already VMEM-resident for the matmuls.
    # Padded weight entries are exactly zero -> |0|*d = 0, sum is exact.
    @pl.when(pl.program_id(0) == 0)
    def _():
        c1 = jnp.sum(jnp.abs(w1).astype(jnp.float32) * d1_ref[...])
        c2 = jnp.sum(jnp.abs(w2).astype(jnp.float32) * d2_ref[...])
        cost_ref[0, 0] = c1 + c2


@partial(jax.jit, static_argnames=("spatial_cost_scale",))
def spatialnet_forward_and_cost(x, w1, b1, w2, b2, d1, d2, spatial_cost_scale=1.0):
    """Fused SpatialNet.forward(x) + SpatialNet.get_cost() in one pallas_call."""
    B, N = x.shape
    H = w1.shape[0]
    O = w2.shape[0]
    w1t, b1p, w2t, b2p, Np, Hp, Op = _prep_padded_params(w1, b1, w2, b2)
    d1t = _pad_dist(d1, Np, Hp)
    d2t = _pad_dist(d2, Hp, Op)

    TB = _pick_batch_tile(_rup(B, 8))
    Bp = _rup(B, TB)                 # every block full -> unmasked stores
    x_pad = jnp.zeros((Bp, Np), x.dtype).at[:B, :N].set(x)
    grid = (Bp // TB,)

    y_pad, raw_cost = pl.pallas_call(
        _fused_fwd_cost_kernel,
        out_shape=(jax.ShapeDtypeStruct((Bp, Op), x.dtype),
                   jax.ShapeDtypeStruct((1, 1), jnp.float32)),
        grid_spec=pltpu.PrefetchScalarGridSpec(
            num_scalar_prefetch=0,
            grid=grid,
            in_specs=[
                pl.BlockSpec((TB, Np), lambda i: (i, 0)),
                pl.BlockSpec((Np, Hp), lambda i: (0, 0)),
                pl.BlockSpec((1, Hp), lambda i: (0, 0)),
                pl.BlockSpec((Hp, Op), lambda i: (0, 0)),
                pl.BlockSpec((1, Op), lambda i: (0, 0)),
                pl.BlockSpec((Np, Hp), lambda i: (0, 0)),
                pl.BlockSpec((Hp, Op), lambda i: (0, 0)),
            ],
            out_specs=(pl.BlockSpec((TB, Op), lambda i: (i, 0)),
                       pl.BlockSpec((1, 1), lambda i: (0, 0), memory_space=SMEM)),
        ),
        compiler_params=pltpu.CompilerParams(
            # serial batch axis: the (1,1) scalar cost is written once on step 0
            # and can never be raced by a second TensorCore.
            dimension_semantics=("arbitrary",)),
    )(x_pad, w1t, b1p, w2t, b2p, d1t, d2t)

    total_params = w1.size + w2.size
    cost = spatial_cost_scale * raw_cost[0, 0] / total_params
    return y_pad[:B, :O], cost


# ---------------------------------------------------------------------------
# Standalone forward (batch-gridded, weights resident, megacore-parallel)
# ---------------------------------------------------------------------------
def _mlp_fwd_kernel(x_ref, w1_ref, b1_ref, w2_ref, b2_ref, o_ref):
    h = jnp.dot(x_ref[...], w1_ref[...], preferred_element_type=jnp.float32)
    h = jnp.maximum(h + b1_ref[...], 0.0)
    y = jnp.dot(h.astype(x_ref.dtype), w2_ref[...],
                preferred_element_type=jnp.float32)
    o_ref[...] = (y + b2_ref[...]).astype(o_ref.dtype)


@partial(jax.jit, static_argnames=("use_bf16",))
def spatialnet_forward(x, w1, b1, w2, b2, use_bf16=False):
    """SpatialNet.forward(x) == wrapped_model(x) for the 2-layer MLP model.

    use_bf16=True casts the MXU inputs to bf16 (f32 accumulation, f32 output);
    only worth it once B is large enough to be MXU/HBM-bound (v6e/v7x)."""
    B, N = x.shape
    O = w2.shape[0]
    w1t, b1p, w2t, b2p, Np, Hp, Op = _prep_padded_params(w1, b1, w2, b2)

    if use_bf16:
        x_in = x.astype(jnp.bfloat16)
        w1t = w1t.astype(jnp.bfloat16)
        w2t = w2t.astype(jnp.bfloat16)
    else:
        x_in = x

    TB = _pick_batch_tile(_rup(B, 8))
    Bp = _rup(B, TB)                 # every block full -> unmasked stores
    x_pad = jnp.zeros((Bp, Np), x_in.dtype).at[:B, :N].set(x_in)
    grid = (Bp // TB,)

    y_pad = pl.pallas_call(
        _mlp_fwd_kernel,
        out_shape=jax.ShapeDtypeStruct((Bp, Op), x.dtype),
        grid_spec=pltpu.PrefetchScalarGridSpec(
            num_scalar_prefetch=0,
            grid=grid,
            in_specs=[
                pl.BlockSpec((TB, Np), lambda i: (i, 0)),
                pl.BlockSpec((Np, Hp), lambda i: (0, 0)),
                pl.BlockSpec((1, Hp), lambda i: (0, 0)),
                pl.BlockSpec((Hp, Op), lambda i: (0, 0)),
                pl.BlockSpec((1, Op), lambda i: (0, 0)),
            ],
            out_specs=pl.BlockSpec((TB, Op), lambda i: (i, 0)),
        ),
        compiler_params=pltpu.CompilerParams(
            dimension_semantics=("parallel",)),
    )(x_pad, w1t, b1p, w2t, b2p)
    return y_pad[:B, :O]


# ---------------------------------------------------------------------------
# Standalone spatial-cost: BOTH layers in a single kernel launch
# ---------------------------------------------------------------------------
def _total_cost_kernel(w1_ref, d1_ref, w2_ref, d2_ref, o_ref):
    c1 = jnp.sum(jnp.abs(w1_ref[...]).astype(jnp.float32) * d1_ref[...])
    c2 = jnp.sum(jnp.abs(w2_ref[...]).astype(jnp.float32) * d2_ref[...])
    o_ref[0, 0] = c1 + c2


@partial(jax.jit, static_argnames=("spatial_cost_scale",))
def spatialnet_get_cost(w1, d1, w2, d2, spatial_cost_scale=1.0):
    H, N = w1.shape
    O = w2.shape[0]
    Np, Hp, Op = _rup(N, _LANE), _rup(H, _LANE), _rup(O, _LANE)
    # lane-dense (128-wide) padded operands; zero padding is exact for the sum
    w1t = jnp.zeros((Np, Hp), w1.dtype).at[:N, :H].set(w1.T)
    w2t = jnp.zeros((Hp, Op), w2.dtype).at[:H, :O].set(w2.T)
    d1t = _pad_dist(d1, Np, Hp)
    d2t = _pad_dist(d2, Hp, Op)
    raw = pl.pallas_call(
        _total_cost_kernel,
        out_shape=jax.ShapeDtypeStruct((1, 1), jnp.float32),
        in_specs=[pl.BlockSpec(memory_space=VMEM)] * 4,
        out_specs=pl.BlockSpec(memory_space=SMEM),
    )(w1t, d1t, w2t, d2t)
    return spatial_cost_scale * raw[0, 0] / (w1.size + w2.size)


# ---------------------------------------------------------------------------
# Distance matrix (plain JAX glue; mirrors compute_distance_matrix, no disk cache)
# ---------------------------------------------------------------------------
def distance_matrix(N, M, A, B, D):
    x_in = jnp.linspace(-A / 2.0, A / 2.0, N)      # (N,)
    x_out = jnp.linspace(-B / 2.0, B / 2.0, M)     # (M,)
    dx = x_out[:, None] - x_in[None, :]            # (M, N)
    return jnp.sqrt(dx ** 2 + D ** 2)              # (M, N); y gap is D


# ---------------------------------------------------------------------------
# main
# ---------------------------------------------------------------------------
if __name__ == "__main__":
    key = jax.random.PRNGKey(0)
    k_x, k_w1, k_b1, k_w2, k_b2 = jax.random.split(key, 5)

    # small shapes: batch=8, in=32, hidden=64, out=32
    Bsz, N, H, O = 8, 32, 64, 32
    A_, B_, D_ = 1.0, 1.0, 1.0

    x = jax.random.normal(k_x, (Bsz, N), jnp.float32)
    # deterministic nn.Linear-style params (PyTorch (out, in) shape convention)
    w1 = jax.random.normal(k_w1, (H, N), jnp.float32) * (1.0 / math.sqrt(N))
    b1 = jax.random.normal(k_b1, (H,), jnp.float32) * 0.01
    w2 = jax.random.normal(k_w2, (O, H), jnp.float32) * (1.0 / math.sqrt(H))
    b2 = jax.random.normal(k_b2, (O,), jnp.float32) * 0.01

    # Distance matrices depend only on static (N, M, A, B, D): compute once, reuse.
    d1 = distance_matrix(N, H, A_, B_, D_)   # (H, N) matches w1
    d2 = distance_matrix(H, O, A_, B_, D_)   # (O, H) matches w2

    # ---- fused forward + spatial wiring cost (single pallas_call) ----
    y, cost = spatialnet_forward_and_cost(x, w1, b1, w2, b2, d1, d2,
                                          spatial_cost_scale=1.0)
    y = jax.block_until_ready(y)
    cost = jax.block_until_ready(cost)

    # references (plain JAX)
    h_ref = jnp.maximum(x @ w1.T + b1, 0.0)
    y_ref = h_ref @ w2.T + b2
    cost_ref = (jnp.sum(jnp.abs(w1) * d1) + jnp.sum(jnp.abs(w2) * d2)) / (w1.size + w2.size)

    assert jnp.allclose(y, y_ref, atol=1e-4, rtol=1e-4), "fused forward mismatch"
    assert jnp.allclose(cost, cost_ref, atol=1e-5, rtol=1e-5), "fused cost mismatch"

    # ---- standalone forward (batch-gridded) and standalone get_cost ----
    y2 = jax.block_until_ready(spatialnet_forward(x, w1, b1, w2, b2))
    assert jnp.allclose(y2, y_ref, atol=1e-4, rtol=1e-4), "forward mismatch"

    cost2 = jax.block_until_ready(
        spatialnet_get_cost(w1, d1, w2, d2, spatial_cost_scale=1.0))
    assert jnp.allclose(cost2, cost_ref, atol=1e-5, rtol=1e-5), "cost mismatch"

    # TODO(synk): SpatialNet.optimize() uses scipy linear_sum_assignment (Hungarian)
    # on host — a data-dependent combinatorial solver with no Pallas equivalent.
    print("KERNEL_OK")
</pallas_src>

<mosaic_0001>
module attributes {stable_mosaic.version = 11 : i64} {
  func.func @_fused_fwd_cost_kernel(%arg0: i32, %arg1: memref<8x128xf32, #tpu.memory_space<vmem>>, %arg2: memref<128x128xf32, #tpu.memory_space<vmem>>, %arg3: memref<1x128xf32, #tpu.memory_space<vmem>>, %arg4: memref<128x128xf32, #tpu.memory_space<vmem>>, %arg5: memref<1x128xf32, #tpu.memory_space<vmem>>, %arg6: memref<128x128xf32, #tpu.memory_space<vmem>>, %arg7: memref<128x128xf32, #tpu.memory_space<vmem>>, %arg8: memref<8x128xf32, #tpu.memory_space<vmem>>, %arg9: memref<1x1xf32, #tpu.memory_space<smem>>) attributes {dimension_semantics = [#tpu.dimension_semantics<arbitrary>], iteration_bounds = array<i64: 1>, scalar_prefetch = 0 : i64, scratch_operands = 0 : i64, tpu.core_type = #tpu.core_type<tc>, window_params = [{transform_indices = @transform_0, window_bounds = array<i64: 8, 128>}, {pipeline_mode = #tpu.pipeline_mode<synchronous>, transform_indices = @transform_1, window_bounds = array<i64: 128, 128>}, {pipeline_mode = #tpu.pipeline_mode<synchronous>, transform_indices = @transform_2, window_bounds = array<i64: 1, 128>}, {pipeline_mode = #tpu.pipeline_mode<synchronous>, transform_indices = @transform_3, window_bounds = array<i64: 128, 128>}, {pipeline_mode = #tpu.pipeline_mode<synchronous>, transform_indices = @transform_4, window_bounds = array<i64: 1, 128>}, {pipeline_mode = #tpu.pipeline_mode<synchronous>, transform_indices = @transform_5, window_bounds = array<i64: 128, 128>}, {pipeline_mode = #tpu.pipeline_mode<synchronous>, transform_indices = @transform_6, window_bounds = array<i64: 128, 128>}, {transform_indices = @transform_7, window_bounds = array<i64: 8, 128>}, {transform_indices = @transform_8, window_bounds = array<i64: 1, 1>}]} {
    %c0 = arith.constant 0 : index
    %c0_0 = arith.constant 0 : index
    %0 = vector.load %arg1[%c0, %c0_0] : memref<8x128xf32, #tpu.memory_space<vmem>>, vector<8x128xf32>
    %c0_1 = arith.constant 0 : index
    %c0_2 = arith.constant 0 : index
    %1 = vector.load %arg2[%c0_1, %c0_2] : memref<128x128xf32, #tpu.memory_space<vmem>>, vector<128x128xf32>
    %c0_3 = arith.constant 0 : index
    %c0_4 = arith.constant 0 : index
    %2 = vector.load %arg4[%c0_3, %c0_4] : memref<128x128xf32, #tpu.memory_space<vmem>>, vector<128x128xf32>
    %cst = arith.constant dense<0.000000e+00> : vector<8x128xf32>
    %3 = tpu.matmul %0, %1, %cst {dimension_numbers = #tpu.dot_dimension_numbers<[1], [0], [0], [1], [0, 0, 1, 1], [], []>} : vector<8x128xf32>, vector<128x128xf32>, vector<8x128xf32> -> vector<8x128xf32>
    %c0_5 = arith.constant 0 : index
    %c0_6 = arith.constant 0 : index
    %4 = vector.load %arg3[%c0_5, %c0_6] : memref<1x128xf32, #tpu.memory_space<vmem>>, vector<1x128xf32>
    %5 = vector.broadcast %4 : vector<1x128xf32> to vector<8x128xf32>
    %6 = arith.addf %3, %5 : vector<8x128xf32>
    %cst_7 = arith.constant 0.000000e+00 : f32
    %7 = vector.broadcast %cst_7 : f32 to vector<8x128xf32>
    %8 = arith.maximumf %6, %7 : vector<8x128xf32>
    %cst_8 = arith.constant dense<0.000000e+00> : vector<8x128xf32>
    %9 = tpu.matmul %8, %2, %cst_8 {dimension_numbers = #tpu.dot_dimension_numbers<[1], [0], [0], [1], [0, 0, 1, 1], [], []>} : vector<8x128xf32>, vector<128x128xf32>, vector<8x128xf32> -> vector<8x128xf32>
    %c0_9 = arith.constant 0 : index
    %c0_10 = arith.constant 0 : index
    %10 = vector.load %arg5[%c0_9, %c0_10] : memref<1x128xf32, #tpu.memory_space<vmem>>, vector<1x128xf32>
    %11 = vector.broadcast %10 : vector<1x128xf32> to vector<8x128xf32>
    %12 = arith.addf %9, %11 : vector<8x128xf32>
    %c0_11 = arith.constant 0 : index
    %c0_12 = arith.constant 0 : index
    %13 = vector.load %arg8[%c0_11, %c0_12] : memref<8x128xf32, #tpu.memory_space<vmem>>, vector<8x128xf32>
    tpu.vector_store %arg8[%c0_11, %c0_12], %12 {strides = array<i32>} : memref<8x128xf32, #tpu.memory_space<vmem>>, vector<8x128xf32>,
    %c0_i32 = arith.constant 0 : i32
    %14 = arith.cmpi eq, %arg0, %c0_i32 : i32
    %15 = arith.extui %14 : i1 to i32
    %c0_i32_13 = arith.constant 0 : i32
    %16 = arith.cmpi ne, %15, %c0_i32_13 : i32
    scf.if %16 {
      %17 = math.absf %1 : vector<128x128xf32>
      %c0_14 = arith.constant 0 : index
      %c0_15 = arith.constant 0 : index
      %18 = vector.load %arg6[%c0_14, %c0_15] : memref<128x128xf32, #tpu.memory_space<vmem>>, vector<128x128xf32>
      %19 = arith.mulf %17, %18 : vector<128x128xf32>
      %20 = vector.shape_cast %19 : vector<128x128xf32> to vector<1x128x128xf32>
      %cst_16 = arith.constant dense<0.000000e+00> : vector<1xf32>
      %21 = vector.multi_reduction <add>, %20, %cst_16 [1, 2] : vector<1x128x128xf32> to vector<1xf32>
      %22 = vector.shape_cast %21 : vector<1xf32> to vector<1x1x1xf32>
      %23 = vector.extract %22[0, 0, 0] : f32 from vector<1x1x1xf32>
      %24 = math.absf %2 : vector<128x128xf32>
      %c0_17 = arith.constant 0 : index
      %c0_18 = arith.constant 0 : index
      %25 = vector.load %arg7[%c0_17, %c0_18] : memref<128x128xf32, #tpu.memory_space<vmem>>, vector<128x128xf32>
      %26 = arith.mulf %24, %25 : vector<128x128xf32>
      %27 = vector.shape_cast %26 : vector<128x128xf32> to vector<1x128x128xf32>
      %cst_19 = arith.constant dense<0.000000e+00> : vector<1xf32>
      %28 = vector.multi_reduction <add>, %27, %cst_19 [1, 2] : vector<1x128x128xf32> to vector<1xf32>
      %29 = vector.shape_cast %28 : vector<1xf32> to vector<1x1x1xf32>
      %30 = vector.extract %29[0, 0, 0] : f32 from vector<1x1x1xf32>
      %31 = arith.addf %23, %30 : f32
      %c0_20 = arith.constant 0 : index
      %c0_21 = arith.constant 0 : index
      %32 = memref.load %arg9[%c0_20, %c0_21] : memref<1x1xf32, #tpu.memory_space<smem>>
      memref.store %31, %arg9[%c0_20, %c0_21] : memref<1x1xf32, #tpu.memory_space<smem>>
    } else {
    }
    return
  }
  func.func @transform_0(%arg0: i32) -> (i32, i32) {
    %c0_i32 = arith.constant 0 : i32
    %c0_i32_0 = arith.constant 0 : i32
    return %arg0, %c0_i32 : i32, i32
  }
  func.func @transform_1(%arg0: i32) -> (i32, i32) {
    %c0_i32 = arith.constant 0 : i32
    %c0_i32_0 = arith.constant 0 : i32
    %c0_i32_1 = arith.constant 0 : i32
    return %c0_i32, %c0_i32_0 : i32, i32
  }
  func.func @transform_2(%arg0: i32) -> (i32, i32) {
    %c0_i32 = arith.constant 0 : i32
    %c0_i32_0 = arith.constant 0 : i32
    %c0_i32_1 = arith.constant 0 : i32
    return %c0_i32, %c0_i32_0 : i32, i32
  }
  func.func @transform_3(%arg0: i32) -> (i32, i32) {
    %c0_i32 = arith.constant 0 : i32
    %c0_i32_0 = arith.constant 0 : i32
    %c0_i32_1 = arith.constant 0 : i32
    return %c0_i32, %c0_i32_0 : i32, i32
  }
  func.func @transform_4(%arg0: i32) -> (i32, i32) {
    %c0_i32 = arith.constant 0 : i32
    %c0_i32_0 = arith.constant 0 : i32
    %c0_i32_1 = arith.constant 0 : i32
    return %c0_i32, %c0_i32_0 : i32, i32
  }
  func.func @transform_5(%arg0: i32) -> (i32, i32) {
    %c0_i32 = arith.constant 0 : i32
    %c0_i32_0 = arith.constant 0 : i32
    %c0_i32_1 = arith.constant 0 : i32
    return %c0_i32, %c0_i32_0 : i32, i32
  }
  func.func @transform_6(%arg0: i32) -> (i32, i32) {
    %c0_i32 = arith.constant 0 : i32
    %c0_i32_0 = arith.constant 0 : i32
    %c0_i32_1 = arith.constant 0 : i32
    return %c0_i32, %c0_i32_0 : i32, i32
  }
  func.func @transform_7(%arg0: i32) -> (i32, i32) {
    %c0_i32 = arith.constant 0 : i32
    %c0_i32_0 = arith.constant 0 : i32
    return %arg0, %c0_i32 : i32, i32
  }
  func.func @transform_8(%arg0: i32) -> (i32, i32) {
    %c0_i32 = arith.constant 0 : i32
    %c0_i32_0 = arith.constant 0 : i32
    %c0_i32_1 = arith.constant 0 : i32
    return %c0_i32, %c0_i32_0 : i32, i32
  }
}

</mosaic_0001>

<llo_original>
// kernel: spatialnet_forward_and_cost.1
$region0: #{spatialnet_forward_and_cost.1}
  #allocation0 [shape = 'u32[]', space=smem, size = 0x4, offset = 0x4, fixed_abs, tag = 'smem constant byte address 0x4 - core index']
  #allocation1 [shape = 'u32[144,128]{1,0:T(1,128)}', space=vmem, size = 0x12000, scoped, tag = 'internal scratch']
  %s0 = inlined_call_operand.vmem [shape: f32[8,128], index: 0, kind: input, shape index: {}]
  %s1 = inlined_call_operand.vmem [shape: f32[128,128], index: 1, kind: input, shape index: {}]
  %s2 = inlined_call_operand.vmem [shape: f32[1,128], index: 2, kind: input, shape index: {}]
  %s3 = inlined_call_operand.vmem [shape: f32[128,128], index: 3, kind: input, shape index: {}]
  %s4 = inlined_call_operand.vmem [shape: f32[1,128], index: 4, kind: input, shape index: {}]
  %s5 = inlined_call_operand.vmem [shape: f32[128,128], index: 5, kind: input, shape index: {}]
  %s6 = inlined_call_operand.vmem [shape: f32[128,128], index: 6, kind: input, shape index: {}]
  %s7 = inlined_call_operand.hbm [shape: f32[8,128], index: 7, kind: output, shape index: {0}]
  %s8 = inlined_call_operand.hbm [shape: f32[1,1], index: 8, kind: output, shape index: {1}]
  %9 = xla_tuple %s7, %s8
  %s10 = sld [smem:[#allocation0]]
  $region50: #{spatialnet_forward_and_cost.1} parent=0
    _
  %s12 = ssub.s32 1, %s10
  %s13 = scalar_select 0, %s12, %s10
  $region1: #{spatialnet_forward_and_cost.1} parent=0
    #allocation2 [shape = 'u8[4096]{0}', space=vmem, size = 0x1000, scoped, tag = 'output window, operand 0, single buffered']
    #allocation3 [shape = 's32[1]{0}', space=sflag, size = 0x4, scoped, tag = 'scoped memory for spatialnet_forward_and_cost.1']
    #allocation4 [shape = 's32[1]{0}', space=sflag, size = 0x4, scoped, tag = 'scoped memory for spatialnet_forward_and_cost.1']
    #allocation5 [shape = 'u8[512]{0}', space=smem, size = 0x200, scoped, tag = 'output window, operand 1, single buffered']
    %14 = vsyncpa [#allocation3], 0
    %15 = vsyncpa [#allocation4], 0
    // Predicated region
    $region2: #{spatialnet_forward_and_cost.1} parent=1 // pred_check
      _
    $region3: #{spatialnet_forward_and_cost.1} parent=1 // pred_check_branch
      %17 = sbr.rel (0) target = $region5
    $region4: #{spatialnet_forward_and_cost.1} parent=1 // pred_region
      _
    $region5: #{spatialnet_forward_and_cost.1} parent=1 // pred_fallthru
      _
    // Predicated region
    $region6: #{spatialnet_forward_and_cost.1} parent=1 // pred_check
      _
    $region7: #{spatialnet_forward_and_cost.1} parent=1 // pred_check_branch
      %19 = sbr.rel (0) target = $region9
    $region8: #{spatialnet_forward_and_cost.1} parent=1 // pred_region
      _
    $region9: #{spatialnet_forward_and_cost.1} parent=1 // pred_fallthru
      _
    // Predicated region
    $region10: #{spatialnet_forward_and_cost.1} parent=1 // pred_check
      _
    $region11: #{spatialnet_forward_and_cost.1} parent=1 // pred_check_branch
      %21 = sbr.rel (0) target = $region13
    $region12: #{spatialnet_forward_and_cost.1} parent=1 // pred_region
      _
    $region13: #{spatialnet_forward_and_cost.1} parent=1 // pred_fallthru
      _
    // Predicated region
    $region14: #{spatialnet_forward_and_cost.1} parent=1 // pred_check
      _
    $region15: #{spatialnet_forward_and_cost.1} parent=1 // pred_check_branch
      %23 = sbr.rel (0) target = $region17
    $region16: #{spatialnet_forward_and_cost.1} parent=1 // pred_region
      _
    $region17: #{spatialnet_forward_and_cost.1} parent=1 // pred_fallthru
      _
    // Predicated region
    $region18: #{spatialnet_forward_and_cost.1} parent=1 // pred_check
      _
    $region19: #{spatialnet_forward_and_cost.1} parent=1 // pred_check_branch
      %25 = sbr.rel (0) target = $region21
    $region20: #{spatialnet_forward_and_cost.1} parent=1 // pred_region
      _
    $region21: #{spatialnet_forward_and_cost.1} parent=1 // pred_fallthru
      _
    // Predicated region
    $region22: #{spatialnet_forward_and_cost.1} parent=1 // pred_check
      _
    $region23: #{spatialnet_forward_and_cost.1} parent=1 // pred_check_branch
      %27 = sbr.rel (0) target = $region25
    $region24: #{spatialnet_forward_and_cost.1} parent=1 // pred_region
      _
    $region25: #{spatialnet_forward_and_cost.1} parent=1 // pred_fallthru
      _
    // Predicated region
    $region26: #{spatialnet_forward_and_cost.1} parent=1 // pred_check
      _
    $region27: #{spatialnet_forward_and_cost.1} parent=1 // pred_check_branch
      %29 = sbr.rel (0) target = $region29
    $region28: #{spatialnet_forward_and_cost.1} parent=1 // pred_region
      _
    $region29: #{spatialnet_forward_and_cost.1} parent=1 // pred_fallthru
      _
    %v30 = vld [vmem:[%s0] sm:$0xff]
    %v31 = vld [vmem:[%s1] sm:$0xff]
    %v32 = vld [vmem:[%s1 + $0x8] sm:$0xff]
    %v33 = vld [vmem:[%s1 + $0x10] sm:$0xff]
    %v34 = vld [vmem:[%s1 + $0x18] sm:$0xff]
    %v35 = vld [vmem:[%s1 + $0x20] sm:$0xff]
    %v36 = vld [vmem:[%s1 + $0x28] sm:$0xff]
    %v37 = vld [vmem:[%s1 + $0x30] sm:$0xff]
    %v38 = vld [vmem:[%s1 + $0x38] sm:$0xff]
    %v39 = vld [vmem:[%s1 + $0x40] sm:$0xff]
    %v40 = vld [vmem:[%s1 + $0x48] sm:$0xff]
    %v41 = vld [vmem:[%s1 + $0x50] sm:$0xff]
    %v42 = vld [vmem:[%s1 + $0x58] sm:$0xff]
    %v43 = vld [vmem:[%s1 + $0x60] sm:$0xff]
    %v44 = vld [vmem:[%s1 + $0x68] sm:$0xff]
    %v45 = vld [vmem:[%s1 + $0x70] sm:$0xff]
    %v46 = vld [vmem:[%s1 + $0x78] sm:$0xff]
    %v47 = vld [vmem:[%s3] sm:$0xff]
    %v48 = vld [vmem:[%s3 + $0x8] sm:$0xff]
    %v49 = vld [vmem:[%s3 + $0x10] sm:$0xff]
    %v50 = vld [vmem:[%s3 + $0x18] sm:$0xff]
    %v51 = vld [vmem:[%s3 + $0x20] sm:$0xff]
    %v52 = vld [vmem:[%s3 + $0x28] sm:$0xff]
    %v53 = vld [vmem:[%s3 + $0x30] sm:$0xff]
    %v54 = vld [vmem:[%s3 + $0x38] sm:$0xff]
    %v55 = vld [vmem:[%s3 + $0x40] sm:$0xff]
    %v56 = vld [vmem:[%s3 + $0x48] sm:$0xff]
    %v57 = vld [vmem:[%s3 + $0x50] sm:$0xff]
    %v58 = vld [vmem:[%s3 + $0x58] sm:$0xff]
    %v59 = vld [vmem:[%s3 + $0x60] sm:$0xff]
    %v60 = vld [vmem:[%s3 + $0x68] sm:$0xff]
    %v61 = vld [vmem:[%s3 + $0x70] sm:$0xff]
    %v62 = vld [vmem:[%s3 + $0x78] sm:$0xff]
    %v63 = vld [vmem:[%s2] sm:$0x1]
    %v65 = vlaneseq
    %v66 = vshrl.u32 %v65, 7
    %v67 = vsub.s32 0, %v66
    %v68 = vrot.slane %v63, %v67
    %70 = vmatprep.subr.mxu0 0.0
    %71 = vmatpush1.msra.mxu0 %v46
    %72 = vmatprep.subr.mxu0 0.0
    %73 = vmatpush1.msra.mxu0 %v45
    %74 = vmatprep.subr.mxu0 0.0
    %75 = vmatpush1.msra.mxu0 %v44
    %76 = vmatprep.subr.mxu0 0.0
    %77 = vmatpush1.msra.mxu0 %v43
    %78 = vmatprep.subr.mxu0 0.0
    %79 = vmatpush1.msra.mxu0 %v42
    %80 = vmatprep.subr.mxu0 0.0
    %81 = vmatpush1.msra.mxu0 %v41
    %82 = vmatprep.subr.mxu0 0.0
    %83 = vmatpush1.msra.mxu0 %v40
    %84 = vmatprep.subr.mxu0 0.0
    %85 = vmatpush1.msra.mxu0 %v39
    %86 = vmatprep.subr.mxu0 0.0
    %87 = vmatpush1.msra.mxu0 %v38
    %88 = vmatprep.subr.mxu0 0.0
    %89 = vmatpush1.msra.mxu0 %v37
    %90 = vmatprep.subr.mxu0 0.0
    %91 = vmatpush1.msra.mxu0 %v36
    %92 = vmatprep.subr.mxu0 0.0
    %93 = vmatpush1.msra.mxu0 %v35
    %94 = vmatprep.subr.mxu0 0.0
    %95 = vmatpush1.msra.mxu0 %v34
    %96 = vmatprep.subr.mxu0 0.0
    %97 = vmatpush1.msra.mxu0 %v33
    %98 = vmatprep.subr.mxu0 0.0
    %99 = vmatpush1.msra.mxu0 %v32
    %100 = vmatprep.subr.mxu0 0.0
    %101 = vmatpush1.msra.mxu0 %v31
    %102 = vmatprep.subr.mxu0 0.0
    %103 = vmatpush2.msra.mxu0 0.0
    %104 = vmatprep.subr.mxu0 0.0
    %105 = vmatpush2.msra.mxu0 0.0
    %106 = vmatprep.subr.mxu0 0.0
    %107 = vmatpush2.msra.mxu0 0.0
    %108 = vmatprep.subr.mxu0 0.0
    %109 = vmatpush2.msra.mxu0 0.0
    %110 = vmatprep.subr.mxu0 0.0
    %111 = vmatpush2.msra.mxu0 0.0
    %112 = vmatprep.subr.mxu0 0.0
    %113 = vmatpush2.msra.mxu0 0.0
    %114 = vmatprep.subr.mxu0 0.0
    %115 = vmatpush2.msra.mxu0 0.0
    %116 = vmatprep.subr.mxu0 0.0
    %117 = vmatpush2.msra.mxu0 0.0
    %118 = vmatprep.subr.mxu0 0.0
    %119 = vmatpush2.msra.mxu0 0.0
    %120 = vmatprep.subr.mxu0 0.0
    %121 = vmatpush2.msra.mxu0 0.0
    %122 = vmatprep.subr.mxu0 0.0
    %123 = vmatpush2.msra.mxu0 0.0
    %124 = vmatprep.subr.mxu0 0.0
    %125 = vmatpush2.msra.mxu0 0.0
    %126 = vmatprep.subr.mxu0 0.0
    %127 = vmatpush2.msra.mxu0 0.0
    %128 = vmatprep.subr.mxu0 0.0
    %129 = vmatpush2.msra.mxu0 0.0
    %130 = vmatprep.subr.mxu0 0.0
    %131 = vmatpush2.msra.mxu0 0.0
    %132 = vmatprep.subr.mxu0 0.0
    %133 = vmatpush2.msra.mxu0 0.0
    %134 = vmatprep.mubr.f32.mxu0 0.0
    %135 = vmatmul.mubr.f32.gmra.mxu0 %v30
    %v136 = vpop.f32.mrf.mxu0
    %v137 = vadd.f32 %v68, %v136
    %v138 = vpop.f32.mrf.mxu0
    %139 = vdwg.mxu0
    %v140 = vmax.f32 %v137, 0.0
    %v141 = vld [vmem:[%s4] sm:$0x1]
    %v143 = vlaneseq
    %v144 = vshrl.u32 %v143, 7
    %v145 = vsub.s32 0, %v144
    %v146 = vrot.slane %v141, %v145
    %148 = vmatprep.subr.mxu0 0.0
    %149 = vmatpush1.msra.mxu0 %v62
    %150 = vmatprep.subr.mxu0 0.0
    %151 = vmatpush1.msra.mxu0 %v61
    %152 = vmatprep.subr.mxu0 0.0
    %153 = vmatpush1.msra.mxu0 %v60
    %154 = vmatprep.subr.mxu0 0.0
    %155 = vmatpush1.msra.mxu0 %v59
    %156 = vmatprep.subr.mxu0 0.0
    %157 = vmatpush1.msra.mxu0 %v58
    %158 = vmatprep.subr.mxu0 0.0
    %159 = vmatpush1.msra.mxu0 %v57
    %160 = vmatprep.subr.mxu0 0.0
    %161 = vmatpush1.msra.mxu0 %v56
    %162 = vmatprep.subr.mxu0 0.0
    %163 = vmatpush1.msra.mxu0 %v55
    %164 = vmatprep.subr.mxu0 0.0
    %165 = vmatpush1.msra.mxu0 %v54
    %166 = vmatprep.subr.mxu0 0.0
    %167 = vmatpush1.msra.mxu0 %v53
    %168 = vmatprep.subr.mxu0 0.0
    %169 = vmatpush1.msra.mxu0 %v52
    %170 = vmatprep.subr.mxu0 0.0
    %171 = vmatpush1.msra.mxu0 %v51
    %172 = vmatprep.subr.mxu0 0.0
    %173 = vmatpush1.msra.mxu0 %v50
    %174 = vmatprep.subr.mxu0 0.0
    %175 = vmatpush1.msra.mxu0 %v49
    %176 = vmatprep.subr.mxu0 0.0
    %177 = vmatpush1.msra.mxu0 %v48
    %178 = vmatprep.subr.mxu0 0.0
    %179 = vmatpush1.msra.mxu0 %v47
    %180 = vmatprep.subr.mxu0 0.0
    %181 = vmatpush2.msra.mxu0 0.0
    %182 = vmatprep.subr.mxu0 0.0
    %183 = vmatpush2.msra.mxu0 0.0
    %184 = vmatprep.subr.mxu0 0.0
    %185 = vmatpush2.msra.mxu0 0.0
    %186 = vmatprep.subr.mxu0 0.0
    %187 = vmatpush2.msra.mxu0 0.0
    %188 = vmatprep.subr.mxu0 0.0
    %189 = vmatpush2.msra.mxu0 0.0
    %190 = vmatprep.subr.mxu0 0.0
    %191 = vmatpush2.msra.mxu0 0.0
    %192 = vmatprep.subr.mxu0 0.0
    %193 = vmatpush2.msra.mxu0 0.0
    %194 = vmatprep.subr.mxu0 0.0
    %195 = vmatpush2.msra.mxu0 0.0
    %196 = vmatprep.subr.mxu0 0.0
    %197 = vmatpush2.msra.mxu0 0.0
    %198 = vmatprep.subr.mxu0 0.0
    %199 = vmatpush2.msra.mxu0 0.0
    %200 = vmatprep.subr.mxu0 0.0
    %201 = vmatpush2.msra.mxu0 0.0
    %202 = vmatprep.subr.mxu0 0.0
    %203 = vmatpush2.msra.mxu0 0.0
    %204 = vmatprep.subr.mxu0 0.0
    %205 = vmatpush2.msra.mxu0 0.0
    %206 = vmatprep.subr.mxu0 0.0
    %207 = vmatpush2.msra.mxu0 0.0
    %208 = vmatprep.subr.mxu0 0.0
    %209 = vmatpush2.msra.mxu0 0.0
    %210 = vmatprep.subr.mxu0 0.0
    %211 = vmatpush2.msra.mxu0 0.0
    %212 = vmatprep.mubr.f32.mxu0 0.0
    %213 = vmatmul.mubr.f32.gmra.mxu0 %v140
    %v214 = vpop.f32.mrf.mxu0
    %v215 = vadd.f32 %v146, %v214
    %v216 = vpop.f32.mrf.mxu0
    %217 = vdwg.mxu0
    %218 = vst [vmem:[#allocation2] sm:$0xff] %v215
    %p219 = scmp.eq.s32.totalorder 0, 0
    // Predicated region
    $region30: #{spatialnet_forward_and_cost.1} parent=1 // pred_check
      %p220 = pneg %p219
    $region31: #{spatialnet_forward_and_cost.1} parent=1 // pred_check_branch
      %222 = sbr.rel (%p220) target = $region33
    $region32: #{spatialnet_forward_and_cost.1} parent=1 // pred_region
      %v223 = vand.u32 2147483647, %v31
      %v224 = vand.u32 2147483647, %v32
      %v225 = vand.u32 2147483647, %v33
      %v226 = vand.u32 2147483647, %v34
      %v227 = vand.u32 2147483647, %v35
      %v228 = vand.u32 2147483647, %v36
      %v229 = vand.u32 2147483647, %v37
      %v230 = vand.u32 2147483647, %v38
      %v231 = vand.u32 2147483647, %v39
      %v232 = vand.u32 2147483647, %v40
      %v233 = vand.u32 2147483647, %v41
      %v234 = vand.u32 2147483647, %v42
      %v235 = vand.u32 2147483647, %v43
      %v236 = vand.u32 2147483647, %v44
      %v237 = vand.u32 2147483647, %v45
      %v238 = vand.u32 2147483647, %v46
      %v239 = vld [vmem:[%s5] sm:$0xff]
      %v240 = vld [vmem:[%s5 + $0x8] sm:$0xff]
      %v241 = vld [vmem:[%s5 + $0x10] sm:$0xff]
      %v242 = vld [vmem:[%s5 + $0x18] sm:$0xff]
      %v243 = vld [vmem:[%s5 + $0x20] sm:$0xff]
      %v244 = vld [vmem:[%s5 + $0x28] sm:$0xff]
      %v245 = vld [vmem:[%s5 + $0x30] sm:$0xff]
      %v246 = vld [vmem:[%s5 + $0x38] sm:$0xff]
      %v247 = vld [vmem:[%s5 + $0x40] sm:$0xff]
      %v248 = vld [vmem:[%s5 + $0x48] sm:$0xff]
      %v249 = vld [vmem:[%s5 + $0x50] sm:$0xff]
      %v250 = vld [vmem:[%s5 + $0x58] sm:$0xff]
      %v251 = vld [vmem:[%s5 + $0x60] sm:$0xff]
      %v252 = vld [vmem:[%s5 + $0x68] sm:$0xff]
      %v253 = vld [vmem:[%s5 + $0x70] sm:$0xff]
      %v254 = vld [vmem:[%s5 + $0x78] sm:$0xff]
      %v255 = vmul.f32 %v223, %v239
      %v256 = vmul.f32 %v224, %v240
      %v257 = vmul.f32 %v225, %v241
      %v258 = vmul.f32 %v226, %v242
      %v259 = vmul.f32 %v227, %v243
      %v260 = vmul.f32 %v228, %v244
      %v261 = vmul.f32 %v229, %v245
      %v262 = vmul.f32 %v230, %v246
      %v263 = vmul.f32 %v231, %v247
      %v264 = vmul.f32 %v232, %v248
      %v265 = vmul.f32 %v233, %v249
      %v266 = vmul.f32 %v234, %v250
      %v267 = vmul.f32 %v235, %v251
      %v268 = vmul.f32 %v236, %v252
      %v269 = vmul.f32 %v237, %v253
      %v270 = vmul.f32 %v238, %v254
      %v271 = vadd.f32 %v255, %v256
      %v272 = vadd.f32 %v271, %v257
      %v273 = vadd.f32 %v272, %v258
      %v274 = vadd.f32 %v273, %v259
      %v275 = vadd.f32 %v274, %v260
      %v276 = vadd.f32 %v275, %v261
      %v277 = vadd.f32 %v276, %v262
      %v278 = vadd.f32 %v277, %v263
      %v279 = vadd.f32 %v278, %v264
      %v280 = vadd.f32 %v279, %v265
      %v281 = vadd.f32 %v280, %v266
      %v282 = vadd.f32 %v281, %v267
      %v283 = vadd.f32 %v282, %v268
      %v284 = vadd.f32 %v283, %v269
      %v285 = vadd.f32 %v284, %v270
      %286 = vadd.xlane.f32.xlu0 %v285
      %v287 = vpop.xlane.xlu0 %286
      %v288 = vrot.slane %v287, 4
      %v289 = vadd.f32 %v287, %v288
      %v290 = vrot.slane %v289, 2
      %v291 = vadd.f32 %v289, %v290
      %v292 = vrot.slane %v291, 1
      %v293 = vadd.f32 %v291, %v292
      %s294 = vtos %v293
      %v295 = vand.u32 2147483647, %v47
      %v296 = vand.u32 2147483647, %v48
      %v297 = vand.u32 2147483647, %v49
      %v298 = vand.u32 2147483647, %v50
      %v299 = vand.u32 2147483647, %v51
      %v300 = vand.u32 2147483647, %v52
      %v301 = vand.u32 2147483647, %v53
      %v302 = vand.u32 2147483647, %v54
      %v303 = vand.u32 2147483647, %v55
      %v304 = vand.u32 2147483647, %v56
      %v305 = vand.u32 2147483647, %v57
      %v306 = vand.u32 2147483647, %v58
      %v307 = vand.u32 2147483647, %v59
      %v308 = vand.u32 2147483647, %v60
      %v309 = vand.u32 2147483647, %v61
      %v310 = vand.u32 2147483647, %v62
      %v311 = vld [vmem:[%s6] sm:$0xff]
      %v312 = vld [vmem:[%s6 + $0x8] sm:$0xff]
      %v313 = vld [vmem:[%s6 + $0x10] sm:$0xff]
      %v314 = vld [vmem:[%s6 + $0x18] sm:$0xff]
      %v315 = vld [vmem:[%s6 + $0x20] sm:$0xff]
      %v316 = vld [vmem:[%s6 + $0x28] sm:$0xff]
      %v317 = vld [vmem:[%s6 + $0x30] sm:$0xff]
      %v318 = vld [vmem:[%s6 + $0x38] sm:$0xff]
      %v319 = vld [vmem:[%s6 + $0x40] sm:$0xff]
      %v320 = vld [vmem:[%s6 + $0x48] sm:$0xff]
      %v321 = vld [vmem:[%s6 + $0x50] sm:$0xff]
      %v322 = vld [vmem:[%s6 + $0x58] sm:$0xff]
      %v323 = vld [vmem:[%s6 + $0x60] sm:$0xff]
      %v324 = vld [vmem:[%s6 + $0x68] sm:$0xff]
      %v325 = vld [vmem:[%s6 + $0x70] sm:$0xff]
      %v326 = vld [vmem:[%s6 + $0x78] sm:$0xff]
      %v327 = vmul.f32 %v295, %v311
      %v328 = vmul.f32 %v296, %v312
      %v329 = vmul.f32 %v297, %v313
      %v330 = vmul.f32 %v298, %v314
      %v331 = vmul.f32 %v299, %v315
      %v332 = vmul.f32 %v300, %v316
      %v333 = vmul.f32 %v301, %v317
      %v334 = vmul.f32 %v302, %v318
      %v335 = vmul.f32 %v303, %v319
      %v336 = vmul.f32 %v304, %v320
      %v337 = vmul.f32 %v305, %v321
      %v338 = vmul.f32 %v306, %v322
      %v339 = vmul.f32 %v307, %v323
      %v340 = vmul.f32 %v308, %v324
      %v341 = vmul.f32 %v309, %v325
      %v342 = vmul.f32 %v310, %v326
      %v343 = vadd.f32 %v327, %v328
      %v344 = vadd.f32 %v343, %v329
      %v345 = vadd.f32 %v344, %v330
      %v346 = vadd.f32 %v345, %v331
      %v347 = vadd.f32 %v346, %v332
      %v348 = vadd.f32 %v347, %v333
      %v349 = vadd.f32 %v348, %v334
      %v350 = vadd.f32 %v349, %v335
      %v351 = vadd.f32 %v350, %v336
      %v352 = vadd.f32 %v351, %v337
      %v353 = vadd.f32 %v352, %v338
      %v354 = vadd.f32 %v353, %v339
      %v355 = vadd.f32 %v354, %v340
      %v356 = vadd.f32 %v355, %v341
      %v357 = vadd.f32 %v356, %v342
      %358 = vadd.xlane.f32.xlu0 %v357
      %v359 = vpop.xlane.xlu0 %358
      %v360 = vrot.slane %v359, 4
      %v361 = vadd.f32 %v359, %v360
      %v362 = vrot.slane %v361, 2
      %v363 = vadd.f32 %v361, %v362
      %v364 = vrot.slane %v363, 1
      %v365 = vadd.f32 %v363, %v364
      %s366 = vtos %v365
      %s367 = sadd.f32 %s294, %s366
      %s368 = scalar_lea.smem [#allocation5], 0
      %369 = sst [smem:[%s368]] %s367
    $region33: #{spatialnet_forward_and_cost.1} parent=1 // pred_fallthru
      _
    // Predicated region
    $region34: #{spatialnet_forward_and_cost.1} parent=1 // pred_check
      _
    $region35: #{spatialnet_forward_and_cost.1} parent=1 // pred_check_branch
      %371 = sbr.rel (0) target = $region37
    $region36: #{spatialnet_forward_and_cost.1} parent=1 // pred_region
      %s373 = ssub.s32 128, 128
      %374 = vsyncadd [#allocation3], %s373
      %s376 = sshll.u32 [#allocation2], 4
      %s377 = int_to_ptr.vmem [resolvable:$true] %s376
      %379 = dma.vmem_to_hbm [thread:$0]  %s377, 128, %s7, [#allocation3]
    $region37: #{spatialnet_forward_and_cost.1} parent=1 // pred_fallthru
      _
    // Predicated region
    $region38: #{spatialnet_forward_and_cost.1} parent=1 // pred_check
      _
    $region39: #{spatialnet_forward_and_cost.1} parent=1 // pred_check_branch
      %381 = sbr.rel (0) target = $region41
    $region40: #{spatialnet_forward_and_cost.1} parent=1 // pred_region
      %s383 = ssub.s32 16, 16
      %384 = vsyncadd [#allocation4], %s383
      %387 = dma.smem_to_hbm [#allocation5], 16, %s8, [#allocation4]
    $region41: #{spatialnet_forward_and_cost.1} parent=1 // pred_fallthru
      _
    // Predicated region
    $region42: #{spatialnet_forward_and_cost.1} parent=1 // pred_check
      _
    $region43: #{spatialnet_forward_and_cost.1} parent=1 // pred_check_branch
      %389 = sbr.rel (0) target = $region45
    $region44: #{spatialnet_forward_and_cost.1} parent=1 // pred_region
      %390 = dma.done [#allocation3], 128
    $region45: #{spatialnet_forward_and_cost.1} parent=1 // pred_fallthru
      _
    // Predicated region
    $region46: #{spatialnet_forward_and_cost.1} parent=1 // pred_check
      _
    $region47: #{spatialnet_forward_and_cost.1} parent=1 // pred_check_branch
      %392 = sbr.rel (0) target = $region49
    $region48: #{spatialnet_forward_and_cost.1} parent=1 // pred_region
      %393 = dma.done [#allocation4], 16
    $region49: #{spatialnet_forward_and_cost.1} parent=1 // pred_fallthru
      _
    %394 = sfence
    %395 = vsyncpa [#allocation3], 1
    %396 = vsyncpa [#allocation4], 1

</llo_original>
